<compile_context>
chip_gen: v7x
topology: tpu7x:2x2x1
jax: 0.10.0
libtpu: 0.0.40
codegen_flags: <defaults>
</compile_context>

<pallas_src>
import jax
import jax.numpy as jnp
from jax.experimental import pallas as pl
from jax.experimental.pallas import tpu as pltpu

H1, H2 = 128, 64


def mlp_kernel(x_ref, w1_ref, b1_ref, w2_ref, b2_ref, w3_ref, b3_ref, o_ref):
    # fc1 + relu  (bf16 MXU matmul, f32 accumulation / bias / activation)
    h1 = jnp.dot(x_ref[...], w1_ref[...], preferred_element_type=jnp.float32)
    h1 = jnp.maximum(h1 + b1_ref[...], 0.0)
    # fc2 + relu
    h2 = jnp.dot(h1.astype(w2_ref.dtype), w2_ref[...],
                 preferred_element_type=jnp.float32)
    h2 = jnp.maximum(h2 + b2_ref[...], 0.0)
    # fc3 + sigmoid (EUP transcendental, f32)
    logits = jnp.dot(h2.astype(w3_ref.dtype), w3_ref[...],
                     preferred_element_type=jnp.float32)
    o_ref[...] = jax.nn.sigmoid(logits + b3_ref[...])


def _pick_tile_b(B, requested):
    """Batch tile: large (amortize per-step overhead), multiple of the 8-row
    sublane, and small enough that the grid has >= 2 steps (megacore) when the
    batch allows it."""
    if B <= 16:
        return B  # single tile covering the whole (tiny) batch
    half = ((B + 1) // 2 + 7) // 8 * 8     # ~B/2 rounded up to a multiple of 8
    tb = min(requested, half)
    tb = max(8, (tb // 8) * 8)
    return min(tb, B)


def recommender_forward(x, params, *, tile_b=2048, compute_dtype=jnp.bfloat16):
    """x: (B, num_books) f32. params: dict w1,b1,w2,b2,w3,b3 (w_i stored (in, out))."""
    B, num_books = x.shape
    tile_b = _pick_tile_b(B, tile_b)
    grid = (pl.cdiv(B, tile_b),)

    # bf16 activations/weights halve HBM traffic; biases stay f32.
    xc = x.astype(compute_dtype)
    w1 = params["w1"].astype(compute_dtype)
    w2 = params["w2"].astype(compute_dtype)
    w3 = params["w3"].astype(compute_dtype)
    b1 = params["b1"].astype(jnp.float32)
    b2 = params["b2"].astype(jnp.float32)
    b3 = params["b3"].astype(jnp.float32)

    flops = 2 * B * (num_books * H1 + H1 * H2 + H2 * num_books)
    bytes_accessed = (
        xc.size * xc.dtype.itemsize
        + B * num_books * 4  # f32 output
        + sum(a.size * a.dtype.itemsize for a in (w1, w2, w3, b1, b2, b3))
    )
    cost = pl.CostEstimate(flops=flops,
                           transcendentals=B * num_books,
                           bytes_accessed=bytes_accessed)

    return pl.pallas_call(
        mlp_kernel,
        out_shape=jax.ShapeDtypeStruct((B, num_books), jnp.float32),
        grid_spec=pltpu.PrefetchScalarGridSpec(
            num_scalar_prefetch=0,
            grid=grid,
            in_specs=[
                pl.BlockSpec((tile_b, num_books), lambda i: (i, 0)),   # x tile
                pl.BlockSpec((num_books, H1), lambda i: (0, 0)),       # W1 (resident)
                pl.BlockSpec((1, H1), lambda i: (0, 0)),               # b1
                pl.BlockSpec((H1, H2), lambda i: (0, 0)),              # W2
                pl.BlockSpec((1, H2), lambda i: (0, 0)),               # b2
                pl.BlockSpec((H2, num_books), lambda i: (0, 0)),       # W3
                pl.BlockSpec((1, num_books), lambda i: (0, 0)),        # b3
            ],
            out_specs=pl.BlockSpec((tile_b, num_books), lambda i: (i, 0)),
        ),
        compiler_params=pltpu.CompilerParams(
            dimension_semantics=("parallel",),
        ),
        cost_estimate=cost,
    )(xc, w1, b1, w2, b2, w3, b3)


def init_params(key, num_books):
    """Deterministic init mimicking nn.Linear's uniform(-1/sqrt(fan_in), +1/sqrt(fan_in))."""
    ks = jax.random.split(key, 6)

    def lin(kw, kb, fan_in, fan_out):
        bound = 1.0 / jnp.sqrt(fan_in)
        # stored as (in, out) so the kernel does x @ W  (== PyTorch x @ W.T)
        w = jax.random.uniform(kw, (fan_in, fan_out), jnp.float32, -bound, bound)
        b = jax.random.uniform(kb, (1, fan_out), jnp.float32, -bound, bound)
        return w, b

    w1, b1 = lin(ks[0], ks[1], num_books, H1)
    w2, b2 = lin(ks[2], ks[3], H1, H2)
    w3, b3 = lin(ks[4], ks[5], H2, num_books)
    return {"w1": w1, "b1": b1, "w2": w2, "b2": b2, "w3": w3, "b3": b3}


def reference_forward(x, p):
    h1 = jnp.maximum(x @ p["w1"] + p["b1"], 0.0)
    h2 = jnp.maximum(h1 @ p["w2"] + p["b2"], 0.0)
    return jax.nn.sigmoid(h2 @ p["w3"] + p["b3"])


if __name__ == "__main__":
    num_books = 256
    batch = 64

    key = jax.random.PRNGKey(0)
    kx, kp = jax.random.split(key)
    x = jax.random.uniform(kx, (batch, num_books), jnp.float32)  # interaction vectors
    params = init_params(kp, num_books)

    out = jax.block_until_ready(recommender_forward(x, params))
    ref = reference_forward(x, params)
    assert out.shape == (batch, num_books)
    assert out.dtype == jnp.float32
    # bf16 matmul inputs -> relaxed tolerance vs the f32 reference
    assert jnp.allclose(out, ref, atol=2e-2, rtol=2e-2), "mismatch vs pure-JAX reference"

    # Ragged last tile (batch not a multiple of the tile) also works.
    x2 = x[:20]
    out2 = jax.block_until_ready(recommender_forward(x2, params, tile_b=16))
    assert jnp.allclose(out2, ref[:20], atol=2e-2, rtol=2e-2), "ragged-tile mismatch"

    print("KERNEL_OK")
</pallas_src>

<mosaic_0001>
module attributes {stable_mosaic.version = 11 : i64} {
  func.func @mlp_kernel(%arg0: i32, %arg1: memref<32x256xbf16, #tpu.memory_space<vmem>>, %arg2: memref<256x128xbf16, #tpu.memory_space<vmem>>, %arg3: memref<1x128xf32, #tpu.memory_space<vmem>>, %arg4: memref<128x64xbf16, #tpu.memory_space<vmem>>, %arg5: memref<1x64xf32, #tpu.memory_space<vmem>>, %arg6: memref<64x256xbf16, #tpu.memory_space<vmem>>, %arg7: memref<1x256xf32, #tpu.memory_space<vmem>>, %arg8: memref<32x256xf32, #tpu.memory_space<vmem>>) attributes {dimension_semantics = [#tpu.dimension_semantics<parallel>], iteration_bounds = array<i64: 2>, scalar_prefetch = 0 : i64, scratch_operands = 0 : i64, tpu.core_type = #tpu.core_type<tc>, window_params = [{transform_indices = @transform_0, window_bounds = array<i64: 32, 256>}, {pipeline_mode = #tpu.pipeline_mode<synchronous>, transform_indices = @transform_1, window_bounds = array<i64: 256, 128>}, {pipeline_mode = #tpu.pipeline_mode<synchronous>, transform_indices = @transform_2, window_bounds = array<i64: 1, 128>}, {pipeline_mode = #tpu.pipeline_mode<synchronous>, transform_indices = @transform_3, window_bounds = array<i64: 128, 64>}, {pipeline_mode = #tpu.pipeline_mode<synchronous>, transform_indices = @transform_4, window_bounds = array<i64: 1, 64>}, {pipeline_mode = #tpu.pipeline_mode<synchronous>, transform_indices = @transform_5, window_bounds = array<i64: 64, 256>}, {pipeline_mode = #tpu.pipeline_mode<synchronous>, transform_indices = @transform_6, window_bounds = array<i64: 1, 256>}, {transform_indices = @transform_7, window_bounds = array<i64: 32, 256>}]} {
    %c0 = arith.constant 0 : index
    %c0_0 = arith.constant 0 : index
    %0 = vector.load %arg1[%c0, %c0_0] : memref<32x256xbf16, #tpu.memory_space<vmem>>, vector<32x256xbf16>
    %c0_1 = arith.constant 0 : index
    %c0_2 = arith.constant 0 : index
    %1 = vector.load %arg2[%c0_1, %c0_2] : memref<256x128xbf16, #tpu.memory_space<vmem>>, vector<256x128xbf16>
    %cst = arith.constant dense<0.000000e+00> : vector<32x128xf32>
    %2 = tpu.matmul %0, %1, %cst {dimension_numbers = #tpu.dot_dimension_numbers<[1], [0], [0], [1], [0, 0, 1, 1], [], []>} : vector<32x256xbf16>, vector<256x128xbf16>, vector<32x128xf32> -> vector<32x128xf32>
    %c0_3 = arith.constant 0 : index
    %c0_4 = arith.constant 0 : index
    %3 = vector.load %arg3[%c0_3, %c0_4] : memref<1x128xf32, #tpu.memory_space<vmem>>, vector<1x128xf32>
    %4 = vector.broadcast %3 : vector<1x128xf32> to vector<32x128xf32>
    %5 = arith.addf %2, %4 : vector<32x128xf32>
    %cst_5 = arith.constant 0.000000e+00 : f32
    %6 = vector.broadcast %cst_5 : f32 to vector<32x128xf32>
    %7 = arith.maximumf %5, %6 : vector<32x128xf32>
    %8 = arith.truncf %7 : vector<32x128xf32> to vector<32x128xbf16>
    %c0_6 = arith.constant 0 : index
    %c0_7 = arith.constant 0 : index
    %9 = vector.load %arg4[%c0_6, %c0_7] : memref<128x64xbf16, #tpu.memory_space<vmem>>, vector<128x64xbf16>
    %cst_8 = arith.constant dense<0.000000e+00> : vector<32x64xf32>
    %10 = tpu.matmul %8, %9, %cst_8 {dimension_numbers = #tpu.dot_dimension_numbers<[1], [0], [0], [1], [0, 0, 1, 1], [], []>} : vector<32x128xbf16>, vector<128x64xbf16>, vector<32x64xf32> -> vector<32x64xf32>
    %c0_9 = arith.constant 0 : index
    %c0_10 = arith.constant 0 : index
    %11 = vector.load %arg5[%c0_9, %c0_10] : memref<1x64xf32, #tpu.memory_space<vmem>>, vector<1x64xf32>
    %12 = vector.broadcast %11 : vector<1x64xf32> to vector<32x64xf32>
    %13 = arith.addf %10, %12 : vector<32x64xf32>
    %cst_11 = arith.constant 0.000000e+00 : f32
    %14 = vector.broadcast %cst_11 : f32 to vector<32x64xf32>
    %15 = arith.maximumf %13, %14 : vector<32x64xf32>
    %16 = arith.truncf %15 : vector<32x64xf32> to vector<32x64xbf16>
    %c0_12 = arith.constant 0 : index
    %c0_13 = arith.constant 0 : index
    %17 = vector.load %arg6[%c0_12, %c0_13] : memref<64x256xbf16, #tpu.memory_space<vmem>>, vector<64x256xbf16>
    %cst_14 = arith.constant dense<0.000000e+00> : vector<32x256xf32>
    %18 = tpu.matmul %16, %17, %cst_14 {dimension_numbers = #tpu.dot_dimension_numbers<[1], [0], [0], [1], [0, 0, 1, 1], [], []>} : vector<32x64xbf16>, vector<64x256xbf16>, vector<32x256xf32> -> vector<32x256xf32>
    %c0_15 = arith.constant 0 : index
    %c0_16 = arith.constant 0 : index
    %19 = vector.load %arg7[%c0_15, %c0_16] : memref<1x256xf32, #tpu.memory_space<vmem>>, vector<1x256xf32>
    %20 = vector.broadcast %19 : vector<1x256xf32> to vector<32x256xf32>
    %21 = arith.addf %18, %20 : vector<32x256xf32>
    %22 = arith.negf %21 : vector<32x256xf32>
    %23 = math.exp %22 : vector<32x256xf32>
    %cst_17 = arith.constant 1.000000e+00 : f32
    %24 = vector.broadcast %cst_17 : f32 to vector<32x256xf32>
    %25 = arith.addf %24, %23 : vector<32x256xf32>
    %26 = arith.divf %24, %25 : vector<32x256xf32>
    %c0_18 = arith.constant 0 : index
    %c0_19 = arith.constant 0 : index
    %27 = vector.load %arg8[%c0_18, %c0_19] : memref<32x256xf32, #tpu.memory_space<vmem>>, vector<32x256xf32>
    tpu.vector_store %arg8[%c0_18, %c0_19], %26 {strides = array<i32>} : memref<32x256xf32, #tpu.memory_space<vmem>>, vector<32x256xf32>,
    return
  }
  func.func @transform_0(%arg0: i32) -> (i32, i32) {
    %c0_i32 = arith.constant 0 : i32
    %c0_i32_0 = arith.constant 0 : i32
    return %arg0, %c0_i32 : i32, i32
  }
  func.func @transform_1(%arg0: i32) -> (i32, i32) {
    %c0_i32 = arith.constant 0 : i32
    %c0_i32_0 = arith.constant 0 : i32
    %c0_i32_1 = arith.constant 0 : i32
    return %c0_i32, %c0_i32_0 : i32, i32
  }
  func.func @transform_2(%arg0: i32) -> (i32, i32) {
    %c0_i32 = arith.constant 0 : i32
    %c0_i32_0 = arith.constant 0 : i32
    %c0_i32_1 = arith.constant 0 : i32
    return %c0_i32, %c0_i32_0 : i32, i32
  }
  func.func @transform_3(%arg0: i32) -> (i32, i32) {
    %c0_i32 = arith.constant 0 : i32
    %c0_i32_0 = arith.constant 0 : i32
    %c0_i32_1 = arith.constant 0 : i32
    return %c0_i32, %c0_i32_0 : i32, i32
  }
  func.func @transform_4(%arg0: i32) -> (i32, i32) {
    %c0_i32 = arith.constant 0 : i32
    %c0_i32_0 = arith.constant 0 : i32
    %c0_i32_1 = arith.constant 0 : i32
    return %c0_i32, %c0_i32_0 : i32, i32
  }
  func.func @transform_5(%arg0: i32) -> (i32, i32) {
    %c0_i32 = arith.constant 0 : i32
    %c0_i32_0 = arith.constant 0 : i32
    %c0_i32_1 = arith.constant 0 : i32
    return %c0_i32, %c0_i32_0 : i32, i32
  }
  func.func @transform_6(%arg0: i32) -> (i32, i32) {
    %c0_i32 = arith.constant 0 : i32
    %c0_i32_0 = arith.constant 0 : i32
    %c0_i32_1 = arith.constant 0 : i32
    return %c0_i32, %c0_i32_0 : i32, i32
  }
  func.func @transform_7(%arg0: i32) -> (i32, i32) {
    %c0_i32 = arith.constant 0 : i32
    %c0_i32_0 = arith.constant 0 : i32
    return %arg0, %c0_i32 : i32, i32
  }
}

</mosaic_0001>

<llo_original>
// kernel: tpu_custom_call.1
$region0: #{tpu_custom_call.1}
  #allocation0 [shape = 'u32[]', space=smem, size = 0x4, offset = 0x4, fixed_abs, tag = 'smem constant byte address 0x4 - core index']
  #allocation1 [shape = 'u32[144,128]{1,0:T(1,128)}', space=vmem, size = 0x12000, scoped, tag = 'internal scratch']
  %s0 = inlined_call_operand.vmem [shape: bf16[64,256], index: 0, kind: input, shape index: {}]
  %s1 = inlined_call_operand.hbm [shape: bf16[256,128], index: 1, kind: input, shape index: {}]
  %s2 = inlined_call_operand.vmem [shape: f32[1,128], index: 2, kind: input, shape index: {}]
  %s3 = inlined_call_operand.vmem [shape: bf16[128,64], index: 3, kind: input, shape index: {}]
  %s4 = inlined_call_operand.vmem [shape: f32[1,64], index: 4, kind: input, shape index: {}]
  %s5 = inlined_call_operand.hbm [shape: bf16[64,256], index: 5, kind: input, shape index: {}]
  %s6 = inlined_call_operand.vmem [shape: f32[1,256], index: 6, kind: input, shape index: {}]
  %s7 = inlined_call_operand.hbm [shape: f32[64,256], index: 7, kind: output, shape index: {}]
  %s8 = sld [smem:[#allocation0]]
  $region69: #{tpu_custom_call.1} parent=0
    _
  %s10 = ssub.s32 1, %s8
  %s11 = scalar_select 0, %s10, %s8
  $region1: #{tpu_custom_call.1} parent=0
    #allocation2 [shape = 'u8[65536]{0}', space=vmem, size = 0x10000, scoped, tag = 'input window, operand 1, single buffered']
    #allocation3 [shape = 's32[2]{0}', space=sflag, size = 0x8, scoped, tag = 'scoped memory for tpu_custom_call.1']
    #allocation4 [shape = 's32[2]{0}', space=sflag, size = 0x8, scoped, tag = 'scoped memory for tpu_custom_call.1']
    #allocation5 [shape = 'u8[32768]{0}', space=vmem, size = 0x8000, scoped, tag = 'input window, operand 5, single buffered']
    #allocation6 [shape = 's32[1]{0}', space=sflag, size = 0x4, scoped, tag = 'scoped memory for tpu_custom_call.1']
    #allocation7 [shape = 'u8[65536]{0}', space=vmem, size = 0x10000, scoped, tag = 'output window, operand 0']
    %12 = vsyncpa [#allocation3], 0
    %13 = vsyncpa [#allocation6], 0
    %14 = vsyncpa [#allocation4], 0
    %s15 = scalar_lea.sflag [#allocation4], 1
    %16 = vsyncpa %s15, 0
    loop: start=0, step=1, limit=4
    $region2: #{tpu_custom_call.1} parent=1 // loop_pre_header
      _
    $region3: #{tpu_custom_call.1} parent=1 // loop_header
      %s18 = sphi 0, %s22
      %p19 = scmp.ge.s32.totalorder %s18, 4
      %s28 = sphi 0, %s30
      %s31 = sphi 0, %s28
      %s32 = sphi 0, %s31
      %s48 = sphi 0, %s32
      %s52 = sphi 0, %s52
      %s54 = sphi 0, %s52
      %s55 = sphi 0, %s54
      %s69 = sphi 0, %s55
      %s73 = sphi 0, %s73
      %s75 = sphi 0, %s73
      %s76 = sphi 0, %s75
      %s90 = sphi 0, %s76
      %s94 = sphi 0, %s94
      %s96 = sphi 0, %s94
      %s97 = sphi 0, %s96
      %s111 = sphi 0, %s97
      %s115 = sphi 0, %s115
      %s117 = sphi 0, %s115
      %s118 = sphi 0, %s117
      %s132 = sphi 0, %s118
      %s136 = sphi 0, %s136
      %s138 = sphi 0, %s136
      %s139 = sphi 0, %s138
      %s153 = sphi 0, %s139
      %s157 = sphi 0, %s157
      %s159 = sphi 0, %s157
      %s160 = sphi 0, %s159
      %s174 = sphi 0, %s160
      %s180 = sphi 0, %s182
      %s183 = sphi 0, %s180
      %s184 = sphi 0, %s183
      %s200 = sphi 0, %s184
    $region4: #{tpu_custom_call.1} parent=1 // loop_header_branch
      %21 = sbr.rel (%p19) target = $region8
    $region5: #{tpu_custom_call.1} parent=1 // loop_body
      %s23 = ssub.s32 %s18, 1
      %s24 = ssub.s32 %s18, 2
      %s25 = sadd.s32 %s18, 1
      %s26 = ssub.s32 %s18, %s25
      %p27 = scmp.eq.s32.totalorder %s26, 0
      %s29 = sadd.s32 %s28, 1
      %s30 = scalar_select %p27, %s28, %s29
      %p33 = pneg %p27
      %p34 = scmp.eq.s32.totalorder %s18, 1
      %p35 = por %p33, %p34
      %p36 = scmp.ne.s32.totalorder %s28, %s31
      %p37 = scmp.eq.s32.totalorder %s18, 0
      %p38 = por %p36, %p37
      %p39 = scmp.ne.s32.totalorder %s28, %s31
      %p40 = scmp.eq.s32.totalorder %s23, 1
      %p41 = por %p39, %p40
      %p42 = scmp.ne.s32.totalorder %s31, %s32
      %p43 = scmp.eq.s32.totalorder %s23, 0
      %p44 = por %p42, %p43
      %p45 = scmp.ne.s32.totalorder %s31, %s32
      %p46 = scmp.eq.s32.totalorder %s24, 1
      %p47 = por %p45, %p46
      %p49 = scmp.ne.s32.totalorder %s32, %s48
      %p50 = scmp.eq.s32.totalorder %s24, 0
      %p51 = por %p49, %p50
      %s53 = sadd.s32 %s52, 1
      %p56 = scmp.eq.s32.totalorder %s18, 1
      %p57 = scmp.ne.s32.totalorder %s52, %s54
      %p58 = scmp.eq.s32.totalorder %s18, 0
      %p59 = por %p57, %p58
      %p60 = scmp.ne.s32.totalorder %s52, %s54
      %p61 = scmp.eq.s32.totalorder %s23, 1
      %p62 = por %p60, %p61
      %p63 = scmp.ne.s32.totalorder %s54, %s55
      %p64 = scmp.eq.s32.totalorder %s23, 0
      %p65 = por %p63, %p64
      %p66 = scmp.ne.s32.totalorder %s54, %s55
      %p67 = scmp.eq.s32.totalorder %s24, 1
      %p68 = por %p66, %p67
      %p70 = scmp.ne.s32.totalorder %s55, %s69
      %p71 = scmp.eq.s32.totalorder %s24, 0
      %p72 = por %p70, %p71
      %s74 = sadd.s32 %s73, 1
      %p77 = scmp.eq.s32.totalorder %s18, 1
      %p78 = scmp.ne.s32.totalorder %s73, %s75
      %p79 = scmp.eq.s32.totalorder %s18, 0
      %p80 = por %p78, %p79
      %p81 = scmp.ne.s32.totalorder %s73, %s75
      %p82 = scmp.eq.s32.totalorder %s23, 1
      %p83 = por %p81, %p82
      %p84 = scmp.ne.s32.totalorder %s75, %s76
      %p85 = scmp.eq.s32.totalorder %s23, 0
      %p86 = por %p84, %p85
      %p87 = scmp.ne.s32.totalorder %s75, %s76
      %p88 = scmp.eq.s32.totalorder %s24, 1
      %p89 = por %p87, %p88
      %p91 = scmp.ne.s32.totalorder %s76, %s90
      %p92 = scmp.eq.s32.totalorder %s24, 0
      %p93 = por %p91, %p92
      %s95 = sadd.s32 %s94, 1
      %p98 = scmp.eq.s32.totalorder %s18, 1
      %p99 = scmp.ne.s32.totalorder %s94, %s96
      %p100 = scmp.eq.s32.totalorder %s18, 0
      %p101 = por %p99, %p100
      %p102 = scmp.ne.s32.totalorder %s94, %s96
      %p103 = scmp.eq.s32.totalorder %s23, 1
      %p104 = por %p102, %p103
      %p105 = scmp.ne.s32.totalorder %s96, %s97
      %p106 = scmp.eq.s32.totalorder %s23, 0
      %p107 = por %p105, %p106
      %p108 = scmp.ne.s32.totalorder %s96, %s97
      %p109 = scmp.eq.s32.totalorder %s24, 1
      %p110 = por %p108, %p109
      %p112 = scmp.ne.s32.totalorder %s97, %s111
      %p113 = scmp.eq.s32.totalorder %s24, 0
      %p114 = por %p112, %p113
      %s116 = sadd.s32 %s115, 1
      %p119 = scmp.eq.s32.totalorder %s18, 1
      %p120 = scmp.ne.s32.totalorder %s115, %s117
      %p121 = scmp.eq.s32.totalorder %s18, 0
      %p122 = por %p120, %p121
      %p123 = scmp.ne.s32.totalorder %s115, %s117
      %p124 = scmp.eq.s32.totalorder %s23, 1
      %p125 = por %p123, %p124
      %p126 = scmp.ne.s32.totalorder %s117, %s118
      %p127 = scmp.eq.s32.totalorder %s23, 0
      %p128 = por %p126, %p127
      %p129 = scmp.ne.s32.totalorder %s117, %s118
      %p130 = scmp.eq.s32.totalorder %s24, 1
      %p131 = por %p129, %p130
      %p133 = scmp.ne.s32.totalorder %s118, %s132
      %p134 = scmp.eq.s32.totalorder %s24, 0
      %p135 = por %p133, %p134
      %s137 = sadd.s32 %s136, 1
      %p140 = scmp.eq.s32.totalorder %s18, 1
      %p141 = scmp.ne.s32.totalorder %s136, %s138
      %p142 = scmp.eq.s32.totalorder %s18, 0
      %p143 = por %p141, %p142
      %p144 = scmp.ne.s32.totalorder %s136, %s138
      %p145 = scmp.eq.s32.totalorder %s23, 1
      %p146 = por %p144, %p145
      %p147 = scmp.ne.s32.totalorder %s138, %s139
      %p148 = scmp.eq.s32.totalorder %s23, 0
      %p149 = por %p147, %p148
      %p150 = scmp.ne.s32.totalorder %s138, %s139
      %p151 = scmp.eq.s32.totalorder %s24, 1
      %p152 = por %p150, %p151
      %p154 = scmp.ne.s32.totalorder %s139, %s153
      %p155 = scmp.eq.s32.totalorder %s24, 0
      %p156 = por %p154, %p155
      %s158 = sadd.s32 %s157, 1
      %p161 = scmp.eq.s32.totalorder %s18, 1
      %p162 = scmp.ne.s32.totalorder %s157, %s159
      %p163 = scmp.eq.s32.totalorder %s18, 0
      %p164 = por %p162, %p163
      %p165 = scmp.ne.s32.totalorder %s157, %s159
      %p166 = scmp.eq.s32.totalorder %s23, 1
      %p167 = por %p165, %p166
      %p168 = scmp.ne.s32.totalorder %s159, %s160
      %p169 = scmp.eq.s32.totalorder %s23, 0
      %p170 = por %p168, %p169
      %p171 = scmp.ne.s32.totalorder %s159, %s160
      %p172 = scmp.eq.s32.totalorder %s24, 1
      %p173 = por %p171, %p172
      %p175 = scmp.ne.s32.totalorder %s160, %s174
      %p176 = scmp.eq.s32.totalorder %s24, 0
      %p177 = por %p175, %p176
      %s178 = ssub.s32 %s18, %s25
      %p179 = scmp.eq.s32.totalorder %s178, 0
      %s181 = sadd.s32 %s180, 1
      %s182 = scalar_select %p179, %s180, %s181
      %p185 = pneg %p179
      %p186 = scmp.eq.s32.totalorder %s18, 1
      %p187 = por %p185, %p186
      %p188 = scmp.ne.s32.totalorder %s180, %s183
      %p189 = scmp.eq.s32.totalorder %s18, 0
      %p190 = por %p188, %p189
      %p191 = scmp.ne.s32.totalorder %s180, %s183
      %p192 = scmp.eq.s32.totalorder %s23, 1
      %p193 = por %p191, %p192
      %p194 = scmp.ne.s32.totalorder %s183, %s184
      %p195 = scmp.eq.s32.totalorder %s23, 0
      %p196 = por %p194, %p195
      %p197 = scmp.ne.s32.totalorder %s183, %s184
      %p198 = scmp.eq.s32.totalorder %s24, 1
      %p199 = por %p197, %p198
      %p201 = scmp.ne.s32.totalorder %s184, %s200
      %p202 = scmp.eq.s32.totalorder %s24, 0
      %p203 = por %p201, %p202
      %p204 = scmp.le.s32.totalorder 1, %s18
      %p205 = scmp.lt.s32.totalorder %s18, 3
      %p206 = pnand %p204, %p205
      %p207 = pneg %p206
      // Predicated region
      $region9: #{tpu_custom_call.1} parent=5 // pred_check
        _
      $region10: #{tpu_custom_call.1} parent=5 // pred_check_branch
        %209 = sbr.rel (%p206) target = $region12
      $region11: #{tpu_custom_call.1} parent=5 // pred_region
        %s210 = ssub.s32 %s18, 1
        // Predicated region
        $region13: #{tpu_custom_call.1} parent=11 // pred_check
          %p211 = pneg %p65
        $region14: #{tpu_custom_call.1} parent=11 // pred_check_branch
          %213 = sbr.rel (%p211) target = $region16
        $region15: #{tpu_custom_call.1} parent=11 // pred_region
          %s215 = ssub.s32 2048, 2048
          %216 = vsyncadd [#allocation3], %s215
          %s217 = sshll.u32 [#allocation2], 4
          %s218 = int_to_ptr.vmem [resolvable:$true] %s217
          %223 = dma.hbm_to_vmem [thread:$0]  %s1, 2048, %s218, [#allocation3], 64, 64, 4
        $region16: #{tpu_custom_call.1} parent=11 // pred_fallthru
          _
        // Predicated region
        $region17: #{tpu_custom_call.1} parent=11 // pred_check
          %p224 = pneg %p86
        $region18: #{tpu_custom_call.1} parent=11 // pred_check_branch
          %226 = sbr.rel (%p224) target = $region20
        $region19: #{tpu_custom_call.1} parent=11 // pred_region
          _
        $region20: #{tpu_custom_call.1} parent=11 // pred_fallthru
          _
        // Predicated region
        $region21: #{tpu_custom_call.1} parent=11 // pred_check
          %p227 = pneg %p107
        $region22: #{tpu_custom_call.1} parent=11 // pred_check_branch
          %229 = sbr.rel (%p227) target = $region24
        $region23: #{tpu_custom_call.1} parent=11 // pred_region
          _
        $region24: #{tpu_custom_call.1} parent=11 // pred_fallthru
          _
        // Predicated region
        $region25: #{tpu_custom_call.1} parent=11 // pred_check
          %p230 = pneg %p128
        $region26: #{tpu_custom_call.1} parent=11 // pred_check_branch
          %232 = sbr.rel (%p230) target = $region28
        $region27: #{tpu_custom_call.1} parent=11 // pred_region
          _
        $region28: #{tpu_custom_call.1} parent=11 // pred_fallthru
          _
        // Predicated region
        $region29: #{tpu_custom_call.1} parent=11 // pred_check
          %p233 = pneg %p149
        $region30: #{tpu_custom_call.1} parent=11 // pred_check_branch
          %235 = sbr.rel (%p233) target = $region32
        $region31: #{tpu_custom_call.1} parent=11 // pred_region
          %s237 = ssub.s32 1024, 1024
          %238 = vsyncadd [#allocation6], %s237
          %s239 = sshll.u32 [#allocation5], 4
          %s240 = int_to_ptr.vmem [resolvable:$true] %s239
          %245 = dma.hbm_to_vmem [thread:$0]  %s5, 1024, %s240, [#allocation6], 128, 128, 8
        $region32: #{tpu_custom_call.1} parent=11 // pred_fallthru
          _
        // Predicated region
        $region33: #{tpu_custom_call.1} parent=11 // pred_check
          %p246 = pneg %p170
        $region34: #{tpu_custom_call.1} parent=11 // pred_check_branch
          %248 = sbr.rel (%p246) target = $region36
        $region35: #{tpu_custom_call.1} parent=11 // pred_region
          _
        $region36: #{tpu_custom_call.1} parent=11 // pred_fallthru
          _
      $region12: #{tpu_custom_call.1} parent=5 // pred_fallthru
        _
      %p249 = scmp.lt.s32.totalorder %s18, 2
      // Predicated region
      $region37: #{tpu_custom_call.1} parent=5 // pred_check
        %p250 = pneg %p249
      $region38: #{tpu_custom_call.1} parent=5 // pred_check_branch
        %252 = sbr.rel (%p250) target = $region40
      $region39: #{tpu_custom_call.1} parent=5 // pred_region
        // Predicated region
        $region41: #{tpu_custom_call.1} parent=39 // pred_check
          %p253 = pneg %p38
        $region42: #{tpu_custom_call.1} parent=39 // pred_check_branch
          %255 = sbr.rel (%p253) target = $region44
        $region43: #{tpu_custom_call.1} parent=39 // pred_region
          %s256 = smul.u32 4, %s18
          %p257 = scmp.lt.s32.totalorder %s256, 7
          %s258 = scalar_select %p257, %s256, 7
          %s259 = smul.addr %s258, 2
          %s260 = smul.addr %s259, 4
          %s261 = scalar_lea.vmem %s0, %s260
          %s262 = smul.u32 4, %s18
        $region44: #{tpu_custom_call.1} parent=39 // pred_fallthru
          _
      $region40: #{tpu_custom_call.1} parent=5 // pred_fallthru
        _
      %p263 = scmp.le.s32.totalorder 1, %s18
      %p264 = scmp.lt.s32.totalorder %s18, 3
      %p265 = pnand %p263, %p264
      %p266 = pneg %p265
      // Predicated region
      $region45: #{tpu_custom_call.1} parent=5 // pred_check
        _
      $region46: #{tpu_custom_call.1} parent=5 // pred_check_branch
        %268 = sbr.rel (%p265) target = $region48
      $region47: #{tpu_custom_call.1} parent=5 // pred_region
        %s269 = ssub.s32 %s18, 1
        // Predicated region
        $region49: #{tpu_custom_call.1} parent=47 // pred_check
          %p270 = pneg %p65
        $region50: #{tpu_custom_call.1} parent=47 // pred_check_branch
          %272 = sbr.rel (%p270) target = $region52
        $region51: #{tpu_custom_call.1} parent=47 // pred_region
          %273 = dma.done [#allocation3], 2048
        $region52: #{tpu_custom_call.1} parent=47 // pred_fallthru
          _
        // Predicated region
        $region53: #{tpu_custom_call.1} parent=47 // pred_check
          %p274 = pneg %p149
        $region54: #{tpu_custom_call.1} parent=47 // pred_check_branch
          %276 = sbr.rel (%p274) target = $region56
        $region55: #{tpu_custom_call.1} parent=47 // pred_region
          %277 = dma.done [#allocation6], 1024
        $region56: #{tpu_custom_call.1} parent=47 // pred_fallthru
          _
        %s278 = smul.u32 4, %s23
        %p279 = scmp.lt.s32.totalorder %s278, 7
        %s280 = scalar_select %p279, %s278, 7
        %s281 = smul.addr %s280, 2
        %s282 = smul.addr %s281, 4
        %s283 = scalar_lea.vmem %s0, %s282
        %p284 = pneg %p44
        %p285 = pneg %p41
        %p286 = pneg %p65
        %p287 = pneg %p62
        %p288 = pneg %p86
        %p289 = pneg %p83
        %p290 = pneg %p107
        %p291 = pneg %p104
        %p292 = pneg %p128
        %p293 = pneg %p125
        %p294 = pneg %p149
        %p295 = pneg %p146
        %p296 = pneg %p170
        %p297 = pneg %p167
        %p298 = pneg %p196
        %p299 = pneg %p193
        %s300 = sand.u32 %s183, 1
        %s301 = scalar_lea.sflag [#allocation4], %s300
        %s302 = sand.u32 %s183, 1
        %s303 = smul.addr %s302, 64
        %s304 = scalar_lea.vmem [#allocation7], %s303
        %s305 = smul.u32 4, %s23
        %p306 = scmp.lt.s32.totalorder %s305, 7
        %s307 = scalar_select %p306, %s305, 7
        %s308 = smul.addr %s307, 2
        %s309 = smul.addr %s308, 4
        %s310 = scalar_lea.vmem %s0, %s309
        %s311 = smul.u32 4, %s23
        %s312 = smul.u32 4, %s23
        %v314 = vld [vmem:[%s310] sm:$0xff]
        %v315 = vld [vmem:[%s310 + $0x8] sm:$0xff]
        %v316 = vld [vmem:[%s310 + $0x10] sm:$0xff]
        %v317 = vld [vmem:[%s310 + $0x18] sm:$0xff]
        %v318 = vld [vmem:[#allocation2] sm:$0xf]
        %v319 = vld [vmem:[#allocation2 + $0x4] sm:$0xf]
        %v320 = vld [vmem:[#allocation2 + $0x8] sm:$0xf]
        %v321 = vld [vmem:[#allocation2 + $0xc] sm:$0xf]
        %v322 = vld [vmem:[#allocation2 + $0x10] sm:$0xf]
        %v323 = vld [vmem:[#allocation2 + $0x14] sm:$0xf]
        %v324 = vld [vmem:[#allocation2 + $0x18] sm:$0xf]
        %v325 = vld [vmem:[#allocation2 + $0x1c] sm:$0xf]
        %v326 = vld [vmem:[#allocation2 + $0x20] sm:$0xf]
        %v327 = vld [vmem:[#allocation2 + $0x24] sm:$0xf]
        %v328 = vld [vmem:[#allocation2 + $0x28] sm:$0xf]
        %v329 = vld [vmem:[#allocation2 + $0x2c] sm:$0xf]
        %v330 = vld [vmem:[#allocation2 + $0x30] sm:$0xf]
        %v331 = vld [vmem:[#allocation2 + $0x34] sm:$0xf]
        %v332 = vld [vmem:[#allocation2 + $0x38] sm:$0xf]
        %v333 = vld [vmem:[#allocation2 + $0x3c] sm:$0xf]
        %v334 = vld [vmem:[#allocation2 + $0x40] sm:$0xf]
        %v335 = vld [vmem:[#allocation2 + $0x44] sm:$0xf]
        %v336 = vld [vmem:[#allocation2 + $0x48] sm:$0xf]
        %v337 = vld [vmem:[#allocation2 + $0x4c] sm:$0xf]
        %v338 = vld [vmem:[#allocation2 + $0x50] sm:$0xf]
        %v339 = vld [vmem:[#allocation2 + $0x54] sm:$0xf]
        %v340 = vld [vmem:[#allocation2 + $0x58] sm:$0xf]
        %v341 = vld [vmem:[#allocation2 + $0x5c] sm:$0xf]
        %v342 = vld [vmem:[#allocation2 + $0x60] sm:$0xf]
        %v343 = vld [vmem:[#allocation2 + $0x64] sm:$0xf]
        %v344 = vld [vmem:[#allocation2 + $0x68] sm:$0xf]
        %v345 = vld [vmem:[#allocation2 + $0x6c] sm:$0xf]
        %v346 = vld [vmem:[#allocation2 + $0x70] sm:$0xf]
        %v347 = vld [vmem:[#allocation2 + $0x74] sm:$0xf]
        %v348 = vld [vmem:[#allocation2 + $0x78] sm:$0xf]
        %v349 = vld [vmem:[#allocation2 + $0x7c] sm:$0xf]
        %v350 = vld [vmem:[%s2] sm:$0x1]
        %v352 = vlaneseq
        %v353 = vshrl.u32 %v352, 7
        %v354 = vsub.s32 0, %v353
        %v355 = vrot.slane %v350, %v354
        %v361 = vunpack.c.l.b16 %v314
        %v362 = vunpack.c.h.b16 %v314
        %v363 = vunpack.c.l.b16 %v315
        %v364 = vunpack.c.h.b16 %v315
        %v365 = vunpack.c.l.b16 %v316
        %v366 = vunpack.c.h.b16 %v316
        %v367 = vunpack.c.l.b16 %v317
        %v368 = vunpack.c.h.b16 %v317
        %v369 = vpack.c.b16 %v363, %v361
        %v370 = vpack.c.b16 %v364, %v362
        %v371 = vpack.c.b16 %v367, %v365
        %v372 = vpack.c.b16 %v368, %v366
        %v409 = vunpack.c.l.b16 %v318
        %v410 = vunpack.c.l.b16 %v319
        %v411 = vunpack.c.l.b16 %v320
        %v412 = vunpack.c.l.b16 %v321
        %v413 = vunpack.c.l.b16 %v322
        %v414 = vunpack.c.l.b16 %v323
        %v415 = vunpack.c.l.b16 %v324
        %v416 = vunpack.c.l.b16 %v325
        %v417 = vunpack.c.l.b16 %v326
        %v418 = vunpack.c.l.b16 %v327
        %v419 = vunpack.c.l.b16 %v328
        %v420 = vunpack.c.l.b16 %v329
        %v421 = vunpack.c.l.b16 %v330
        %v422 = vunpack.c.l.b16 %v331
        %v423 = vunpack.c.l.b16 %v332
        %v424 = vunpack.c.l.b16 %v333
        %v425 = vunpack.c.l.b16 %v334
        %v426 = vunpack.c.l.b16 %v335
        %v427 = vunpack.c.l.b16 %v336
        %v428 = vunpack.c.l.b16 %v337
        %v429 = vunpack.c.l.b16 %v338
        %v430 = vunpack.c.l.b16 %v339
        %v431 = vunpack.c.l.b16 %v340
        %v432 = vunpack.c.l.b16 %v341
        %v433 = vunpack.c.l.b16 %v342
        %v434 = vunpack.c.l.b16 %v343
        %v435 = vunpack.c.l.b16 %v344
        %v436 = vunpack.c.l.b16 %v345
        %v437 = vunpack.c.l.b16 %v346
        %v438 = vunpack.c.l.b16 %v347
        %v439 = vunpack.c.l.b16 %v348
        %v440 = vunpack.c.l.b16 %v349
        %v441 = vpack.c.b16 %v410, %v409
        %v442 = vpack.c.b16 %v412, %v411
        %v443 = vpack.c.b16 %v414, %v413
        %v444 = vpack.c.b16 %v416, %v415
        %v445 = vpack.c.b16 %v418, %v417
        %v446 = vpack.c.b16 %v420, %v419
        %v447 = vpack.c.b16 %v422, %v421
        %v448 = vpack.c.b16 %v424, %v423
        %v449 = vpack.c.b16 %v426, %v425
        %v450 = vpack.c.b16 %v428, %v427
        %v451 = vpack.c.b16 %v430, %v429
        %v452 = vpack.c.b16 %v432, %v431
        %v453 = vpack.c.b16 %v434, %v433
        %v454 = vpack.c.b16 %v436, %v435
        %v455 = vpack.c.b16 %v438, %v437
        %v456 = vpack.c.b16 %v440, %v439
        %473 = vmatprep.subr.bf16.mxu0 0
        %474 = vmatpush1.bf16.msra.mxu0 %v441
        %475 = vmatprep.subr.bf16.mxu0 0
        %476 = vmatpush1.bf16.msra.mxu0 %v442
        %477 = vmatprep.subr.bf16.mxu0 0
        %478 = vmatpush1.bf16.msra.mxu0 %v443
        %479 = vmatprep.subr.bf16.mxu0 0
        %480 = vmatpush1.bf16.msra.mxu0 %v444
        %481 = vmatprep.subr.bf16.mxu0 0
        %482 = vmatpush1.bf16.msra.mxu0 %v445
        %483 = vmatprep.subr.bf16.mxu0 0
        %484 = vmatpush1.bf16.msra.mxu0 %v446
        %485 = vmatprep.subr.bf16.mxu0 0
        %486 = vmatpush1.bf16.msra.mxu0 %v447
        %487 = vmatprep.subr.bf16.mxu0 0
        %488 = vmatpush1.bf16.msra.mxu0 %v448
        %489 = vmatprep.subr.bf16.mxu0 0
        %490 = vmatpush1.bf16.msra.mxu0 %v449
        %491 = vmatprep.subr.bf16.mxu0 0
        %492 = vmatpush1.bf16.msra.mxu0 %v450
        %493 = vmatprep.subr.bf16.mxu0 0
        %494 = vmatpush1.bf16.msra.mxu0 %v451
        %495 = vmatprep.subr.bf16.mxu0 0
        %496 = vmatpush1.bf16.msra.mxu0 %v452
        %497 = vmatprep.subr.bf16.mxu0 0
        %498 = vmatpush1.bf16.msra.mxu0 %v453
        %499 = vmatprep.subr.bf16.mxu0 0
        %500 = vmatpush1.bf16.msra.mxu0 %v454
        %501 = vmatprep.subr.bf16.mxu0 0
        %502 = vmatpush1.bf16.msra.mxu0 %v455
        %503 = vmatprep.subr.bf16.mxu0 0
        %504 = vmatpush1.bf16.msra.mxu0 %v456
        %505 = vmatprep.mubr.bf16.mxu0 %v370
        %506 = vmatmul.mubr.bf16.gmra.mrb[0].mxu0 %v369
        %v507 = vpop.f32.mrb[0].mxu0
        %v508 = vadd.f32 %v355, %v507
        %v509 = vpop.f32.mrb[0].mxu0
        %v510 = vpop.f32.mrb[0].mxu0
        %v511 = vadd.f32 %v355, %v510
        %v512 = vpop.f32.mrb[0].mxu0
        %513 = vmatprep.mubr.bf16.mxu0 %v372
        %514 = vmatmul.mubr.bf16.gmra.mrb[0].mxu0 %v371
        %v515 = vpop.f32.mrb[0].mxu0
        %v516 = vadd.f32 %v355, %v515
        %v517 = vpop.f32.mrb[0].mxu0
        %v518 = vpop.f32.mrb[0].mxu0
        %v519 = vadd.f32 %v355, %v518
        %v520 = vpop.f32.mrb[0].mxu0
        %521 = vdwg.mxu0
        %v522 = vmax.f32 %v508, 0.0
        %v523 = vmax.f32 %v511, 0.0
        %v524 = vmax.f32 %v516, 0.0
        %v525 = vmax.f32 %v519, 0.0
        %v526 = vpack.c.bf16 %v523, %v522
        %v527 = vpack.c.bf16 %v525, %v524
        %v528 = vld [vmem:[%s3] sm:$0xf]
        %v529 = vld [vmem:[%s3 + $0x4] sm:$0xf]
        %v530 = vld [vmem:[%s3 + $0x8] sm:$0xf]
        %v531 = vld [vmem:[%s3 + $0xc] sm:$0xf]
        %v532 = vld [vmem:[%s3 + $0x10] sm:$0xf]
        %v533 = vld [vmem:[%s3 + $0x14] sm:$0xf]
        %v534 = vld [vmem:[%s3 + $0x18] sm:$0xf]
        %v535 = vld [vmem:[%s3 + $0x1c] sm:$0xf]
        %v536 = vld [vmem:[%s3 + $0x20] sm:$0xf]
        %v537 = vld [vmem:[%s3 + $0x24] sm:$0xf]
        %v538 = vld [vmem:[%s3 + $0x28] sm:$0xf]
        %v539 = vld [vmem:[%s3 + $0x2c] sm:$0xf]
        %v540 = vld [vmem:[%s3 + $0x30] sm:$0xf]
        %v541 = vld [vmem:[%s3 + $0x34] sm:$0xf]
        %v542 = vld [vmem:[%s3 + $0x38] sm:$0xf]
        %v543 = vld [vmem:[%s3 + $0x3c] sm:$0xf]
        %v544 = vld [vmem:[%s4] sm:$0x1]
        %v546 = vlaneseq
        %v547 = vshrl.u32 %v546, 7
        %v548 = vsub.s32 0, %v547
        %v549 = vrot.slane %v544, %v548
        %v567 = vunpack.c.l.b16 %v528
        %v568 = vunpack.c.l.b16 %v529
        %v569 = vunpack.c.l.b16 %v530
        %v570 = vunpack.c.l.b16 %v531
        %v571 = vunpack.c.l.b16 %v532
        %v572 = vunpack.c.l.b16 %v533
        %v573 = vunpack.c.l.b16 %v534
        %v574 = vunpack.c.l.b16 %v535
        %v575 = vunpack.c.l.b16 %v536
        %v576 = vunpack.c.l.b16 %v537
        %v577 = vunpack.c.l.b16 %v538
        %v578 = vunpack.c.l.b16 %v539
        %v579 = vunpack.c.l.b16 %v540
        %v580 = vunpack.c.l.b16 %v541
        %v581 = vunpack.c.l.b16 %v542
        %v582 = vunpack.c.l.b16 %v543
        %v583 = vpack.c.b16 %v568, %v567
        %v584 = vpack.c.b16 %v570, %v569
        %v585 = vpack.c.b16 %v572, %v571
        %v586 = vpack.c.b16 %v574, %v573
        %v587 = vpack.c.b16 %v576, %v575
        %v588 = vpack.c.b16 %v578, %v577
        %v589 = vpack.c.b16 %v580, %v579
        %v590 = vpack.c.b16 %v582, %v581
        %599 = vmatprep.subr.bf16.mxu0 0
        %600 = vmatpush1.bf16.msra.mxu0 %v583
        %601 = vmatprep.subr.bf16.mxu0 0
        %602 = vmatpush1.bf16.msra.mxu0 %v584
        %603 = vmatprep.subr.bf16.mxu0 0
        %604 = vmatpush1.bf16.msra.mxu0 %v585
        %605 = vmatprep.subr.bf16.mxu0 0
        %606 = vmatpush1.bf16.msra.mxu0 %v586
        %607 = vmatprep.subr.bf16.mxu0 0
        %608 = vmatpush1.bf16.msra.mxu0 %v587
        %609 = vmatprep.subr.bf16.mxu0 0
        %610 = vmatpush1.bf16.msra.mxu0 %v588
        %611 = vmatprep.subr.bf16.mxu0 0
        %612 = vmatpush1.bf16.msra.mxu0 %v589
        %613 = vmatprep.subr.bf16.mxu0 0
        %614 = vmatpush1.bf16.msra.mxu0 %v590
        %615 = vmatprep.subr.bf16.mxu0 0
        %616 = vmatpush1.bf16.msra.mxu0 0
        %617 = vmatprep.subr.bf16.mxu0 0
        %618 = vmatpush1.bf16.msra.mxu0 0
        %619 = vmatprep.subr.bf16.mxu0 0
        %620 = vmatpush1.bf16.msra.mxu0 0
        %621 = vmatprep.subr.bf16.mxu0 0
        %622 = vmatpush1.bf16.msra.mxu0 0
        %623 = vmatprep.subr.bf16.mxu0 0
        %624 = vmatpush1.bf16.msra.mxu0 0
        %625 = vmatprep.subr.bf16.mxu0 0
        %626 = vmatpush1.bf16.msra.mxu0 0
        %627 = vmatprep.subr.bf16.mxu0 0
        %628 = vmatpush1.bf16.msra.mxu0 0
        %629 = vmatprep.subr.bf16.mxu0 0
        %630 = vmatpush1.bf16.msra.mxu0 0
        %631 = vmatprep.mubr.bf16.mxu0 0
        %632 = vmatmul.mubr.bf16.gmra.mrb[0].mxu0 %v526
        %v633 = vpop.f32.mrb[0].mxu0
        %v634 = vadd.f32 %v549, %v633
        %v635 = vpop.f32.mrb[0].mxu0
        %v636 = vpop.f32.mrb[0].mxu0
        %v637 = vadd.f32 %v549, %v636
        %v638 = vpop.f32.mrb[0].mxu0
        %639 = vmatprep.mubr.bf16.mxu0 0
        %640 = vmatmul.mubr.bf16.gmra.mrb[0].mxu0 %v527
        %v641 = vpop.f32.mrb[0].mxu0
        %v642 = vadd.f32 %v549, %v641
        %v643 = vpop.f32.mrb[0].mxu0
        %v644 = vpop.f32.mrb[0].mxu0
        %v645 = vadd.f32 %v549, %v644
        %v646 = vpop.f32.mrb[0].mxu0
        %647 = vdwg.mxu0
        %v648 = vmax.f32 %v634, 0.0
        %v649 = vmax.f32 %v637, 0.0
        %v650 = vmax.f32 %v642, 0.0
        %v651 = vmax.f32 %v645, 0.0
        %v652 = vpack.c.bf16 %v649, %v648
        %v653 = vpack.c.bf16 %v651, %v650
        %v654 = vld [vmem:[#allocation5] sm:$0xff]
        %v655 = vld [vmem:[#allocation5 + $0x8] sm:$0xff]
        %v656 = vld [vmem:[#allocation5 + $0x10] sm:$0xff]
        %v657 = vld [vmem:[#allocation5 + $0x18] sm:$0xff]
        %v658 = vld [vmem:[#allocation5 + $0x20] sm:$0xff]
        %v659 = vld [vmem:[#allocation5 + $0x28] sm:$0xff]
        %v660 = vld [vmem:[#allocation5 + $0x30] sm:$0xff]
        %v661 = vld [vmem:[#allocation5 + $0x38] sm:$0xff]
        %v662 = vld [vmem:[%s6] sm:$0x3]
        %v664 = vlaneseq
        %v665 = vshrl.u32 %v664, 7
        %v666 = vsub.s32 0, %v665
        %v667 = vrot.slane %v662, %v666
        %v668 = vlaneseq
        %v669 = vshrl.u32 %v668, 7
        %v670 = vsub.s32 1, %v669
        %v671 = vrot.slane %v662, %v670
        %v682 = vunpack.c.l.b16 %v654
        %v683 = vunpack.c.h.b16 %v654
        %v684 = vunpack.c.l.b16 %v655
        %v685 = vunpack.c.h.b16 %v655
        %v686 = vunpack.c.l.b16 %v656
        %v687 = vunpack.c.h.b16 %v656
        %v688 = vunpack.c.l.b16 %v657
        %v689 = vunpack.c.h.b16 %v657
        %v690 = vunpack.c.l.b16 %v658
        %v691 = vunpack.c.h.b16 %v658
        %v692 = vunpack.c.l.b16 %v659
        %v693 = vunpack.c.h.b16 %v659
        %v694 = vunpack.c.l.b16 %v660
        %v695 = vunpack.c.h.b16 %v660
        %v696 = vunpack.c.l.b16 %v661
        %v697 = vunpack.c.h.b16 %v661
        %v698 = vpack.c.b16 %v684, %v682
        %v699 = vpack.c.b16 %v685, %v683
        %v700 = vpack.c.b16 %v688, %v686
        %v701 = vpack.c.b16 %v689, %v687
        %v702 = vpack.c.b16 %v692, %v690
        %v703 = vpack.c.b16 %v693, %v691
        %v704 = vpack.c.b16 %v696, %v694
        %v705 = vpack.c.b16 %v697, %v695
        %vm714 = vcmask 523264
        %v716 = vsel %vm714, %v652, 0
        %v719 = vsel %vm714, %v653, 0
        %721 = vmatprep.subr.bf16.mxu0 %v699
        %722 = vmatpush1.bf16.msra.mxu0 %v698
        %723 = vmatprep.subr.bf16.mxu0 %v701
        %724 = vmatpush1.bf16.msra.mxu0 %v700
        %725 = vmatprep.subr.bf16.mxu0 %v703
        %726 = vmatpush1.bf16.msra.mxu0 %v702
        %727 = vmatprep.subr.bf16.mxu0 %v705
        %728 = vmatpush1.bf16.msra.mxu0 %v704
        %729 = vmatprep.subr.bf16.mxu0 0
        %730 = vmatpush1.bf16.msra.mxu0 0
        %731 = vmatprep.subr.bf16.mxu0 0
        %732 = vmatpush1.bf16.msra.mxu0 0
        %733 = vmatprep.subr.bf16.mxu0 0
        %734 = vmatpush1.bf16.msra.mxu0 0
        %735 = vmatprep.subr.bf16.mxu0 0
        %736 = vmatpush1.bf16.msra.mxu0 0
        %737 = vmatprep.subr.bf16.mxu0 0
        %738 = vmatpush1.bf16.msra.mxu0 0
        %739 = vmatprep.subr.bf16.mxu0 0
        %740 = vmatpush1.bf16.msra.mxu0 0
        %741 = vmatprep.subr.bf16.mxu0 0
        %742 = vmatpush1.bf16.msra.mxu0 0
        %743 = vmatprep.subr.bf16.mxu0 0
        %744 = vmatpush1.bf16.msra.mxu0 0
        %745 = vmatprep.subr.bf16.mxu0 0
        %746 = vmatpush1.bf16.msra.mxu0 0
        %747 = vmatprep.subr.bf16.mxu0 0
        %748 = vmatpush1.bf16.msra.mxu0 0
        %749 = vmatprep.subr.bf16.mxu0 0
        %750 = vmatpush1.bf16.msra.mxu0 0
        %751 = vmatprep.subr.bf16.mxu0 0
        %752 = vmatpush1.bf16.msra.mxu0 0
        %753 = vmatprep.mubr.bf16.mxu0 0
        %754 = vmatmul.mubr.bf16.gmra.mrb[0].mxu0 %v716
        %v755 = vpop.f32.mrb[0].mxu0
        %v756 = vadd.f32 %v667, %v755
        %v757 = vpop.f32.mrb[0].mxu0
        %v758 = vadd.f32 %v671, %v757
        %v759 = vpop.f32.mrb[0].mxu0
        %v760 = vadd.f32 %v667, %v759
        %v761 = vpop.f32.mrb[0].mxu0
        %v762 = vadd.f32 %v671, %v761
        %763 = vmatprep.mubr.bf16.mxu0 0
        %764 = vmatmul.mubr.bf16.gmra.mrb[0].mxu0 %v719
        %v765 = vpop.f32.mrb[0].mxu0
        %v766 = vadd.f32 %v667, %v765
        %v767 = vpop.f32.mrb[0].mxu0
        %v768 = vadd.f32 %v671, %v767
        %v769 = vpop.f32.mrb[0].mxu0
        %v770 = vadd.f32 %v667, %v769
        %v771 = vpop.f32.mrb[0].mxu0
        %v772 = vadd.f32 %v671, %v771
        %773 = vdwg.mxu0
        %v774 = vxor.u32 %v756, 2147483648
        %v775 = vxor.u32 %v758, 2147483648
        %v776 = vxor.u32 %v760, 2147483648
        %v777 = vxor.u32 %v762, 2147483648
        %v778 = vxor.u32 %v766, 2147483648
        %v779 = vxor.u32 %v768, 2147483648
        %v780 = vxor.u32 %v770, 2147483648
        %v781 = vxor.u32 %v772, 2147483648
        %v782 = vmul.f32 %v774, 1.442695
        %v783 = vpow.pop %v782
        %v784 = vmul.f32 %v775, 1.442695
        %v785 = vpow.pop %v784
        %v786 = vmul.f32 %v776, 1.442695
        %v787 = vpow.pop %v786
        %v788 = vmul.f32 %v777, 1.442695
        %v789 = vpow.pop %v788
        %v790 = vmul.f32 %v778, 1.442695
        %v791 = vpow.pop %v790
        %v792 = vmul.f32 %v779, 1.442695
        %v793 = vpow.pop %v792
        %v794 = vmul.f32 %v780, 1.442695
        %v795 = vpow.pop %v794
        %v796 = vmul.f32 %v781, 1.442695
        %v797 = vpow.pop %v796
        %v798 = vadd.f32 %v783, 1.0
        %v799 = vadd.f32 %v785, 1.0
        %v800 = vadd.f32 %v787, 1.0
        %v801 = vadd.f32 %v789, 1.0
        %v802 = vadd.f32 %v791, 1.0
        %v803 = vadd.f32 %v793, 1.0
        %v804 = vadd.f32 %v795, 1.0
        %v805 = vadd.f32 %v797, 1.0
        %v806 = vrcp.pop %v798
        %v807 = vmul.f32 1.0, %v806
        %v808 = vrcp.pop %v799
        %v809 = vmul.f32 1.0, %v808
        %v810 = vrcp.pop %v800
        %v811 = vmul.f32 1.0, %v810
        %v812 = vrcp.pop %v801
        %v813 = vmul.f32 1.0, %v812
        %v814 = vrcp.pop %v802
        %v815 = vmul.f32 1.0, %v814
        %v816 = vrcp.pop %v803
        %v817 = vmul.f32 1.0, %v816
        %v818 = vrcp.pop %v804
        %v819 = vmul.f32 1.0, %v818
        %v820 = vrcp.pop %v805
        %v821 = vmul.f32 1.0, %v820
        %822 = vst [vmem:[%s304] sm:$0xff] %v807
        %823 = vst [vmem:[%s304 + $0x8] sm:$0xff] %v809
        %824 = vst [vmem:[%s304 + $0x10] sm:$0xff] %v811
        %825 = vst [vmem:[%s304 + $0x18] sm:$0xff] %v813
        %826 = vst [vmem:[%s304 + $0x20] sm:$0xff] %v815
        %827 = vst [vmem:[%s304 + $0x28] sm:$0xff] %v817
        %828 = vst [vmem:[%s304 + $0x30] sm:$0xff] %v819
        %829 = vst [vmem:[%s304 + $0x38] sm:$0xff] %v821
        %s830 = sand.u32 %s183, 1
        %s831 = scalar_lea.sflag [#allocation4], %s830
        %s832 = sand.u32 %s183, 1
        %s833 = smul.addr %s832, 64
        %s834 = scalar_lea.vmem [#allocation7], %s833
        // Predicated region
        $region57: #{tpu_custom_call.1} parent=47 // pred_check
          %p835 = pneg %p193
        $region58: #{tpu_custom_call.1} parent=47 // pred_check_branch
          %837 = sbr.rel (%p835) target = $region60
        $region59: #{tpu_custom_call.1} parent=47 // pred_region
          %s838 = smul.u32 4, %s23
          %s840 = ssub.s32 1024, 1024
          %841 = vsyncadd %s831, %s840
          %s842 = smul.addr %s838, 2
          %s843 = smul.addr %s842, 128
          %s844 = scalar_lea.hbm %s7, %s843
          %s845 = sshll.u32 %s834, 4
          %s846 = int_to_ptr.vmem [resolvable:$true] %s845
          %851 = dma.vmem_to_hbm [thread:$0]  %s846, 1024, %s844, %s831, 256, 256, 16
        $region60: #{tpu_custom_call.1} parent=47 // pred_fallthru
          _
      $region48: #{tpu_custom_call.1} parent=5 // pred_fallthru
        _
      %p852 = scmp.le.s32.totalorder 2, %s18
      // Predicated region
      $region61: #{tpu_custom_call.1} parent=5 // pred_check
        %p853 = pneg %p852
      $region62: #{tpu_custom_call.1} parent=5 // pred_check_branch
        %855 = sbr.rel (%p853) target = $region64
      $region63: #{tpu_custom_call.1} parent=5 // pred_region
        %s856 = ssub.s32 %s18, 2
        // Predicated region
        $region65: #{tpu_custom_call.1} parent=63 // pred_check
          %p857 = pneg %p199
        $region66: #{tpu_custom_call.1} parent=63 // pred_check_branch
          %859 = sbr.rel (%p857) target = $region68
        $region67: #{tpu_custom_call.1} parent=63 // pred_region
          %s860 = sand.u32 %s184, 1
          %s861 = scalar_lea.sflag [#allocation4], %s860
          %s862 = sand.u32 %s184, 1
          %s863 = smul.addr %s862, 64
          %s864 = scalar_lea.vmem [#allocation7], %s863
          %865 = dma.done %s861, 1024
        $region68: #{tpu_custom_call.1} parent=63 // pred_fallthru
          _
      $region64: #{tpu_custom_call.1} parent=5 // pred_fallthru
        _
    $region6: #{tpu_custom_call.1} parent=1 // loop_footer
      %s22 = sadd.s32 1, %s18
    $region7: #{tpu_custom_call.1} parent=1 // loop_footer_branch
      %17 = sbr.rel target = $region3
    $region8: #{tpu_custom_call.1} parent=1 // loop_exit
      _
    %866 = vsyncpa [#allocation3], 1
    %s867 = scalar_lea.sflag [#allocation3], 1
    %868 = vsyncpa %s867, 1
    %869 = vsyncpa [#allocation6], 1
    %870 = vsyncpa [#allocation4], 1
    %s871 = scalar_lea.sflag [#allocation4], 1
    %872 = vsyncpa %s871, 1

</llo_original>
